<compile_context>
chip_gen: v6e
topology: v6e:2x2x1
jax: 0.10.0
libtpu: 0.0.40
codegen_flags: <defaults>
</compile_context>

<pallas_src>
import jax
import jax.numpy as jnp
from jax.experimental import pallas as pl
from jax.experimental.pallas import tpu as pltpu


def _implicitm_kernel(scale_ref, x_ref, o_ref):
    # scale_ref: (TR, 1) in out dtype; x_ref: (TR, THW) in x dtype;
    # o_ref: (TR, THW) in out dtype.  One broadcast + multiply per block (VPU).
    o_ref[...] = x_ref[...].astype(o_ref.dtype) * scale_ref[...]


def _round_up(a, b):
    return ((a + b - 1) // b) * b


def implicit_m(x, implicit, *,
               target_block_bytes=4 * 1024 * 1024,
               vmem_limit_bytes=32 * 1024 * 1024,
               donate_x=False):
    """Pallas equivalent of ImplicitM.forward.

    x:        [N, C, H, W]
    implicit: [1, C, 1, 1]
    returns   [N, C, H, W] == implicit * x, in promote_types(x.dtype, implicit.dtype)
    """
    N, C, H, W = x.shape
    HW = H * W
    R = N * C

    # Match PyTorch type promotion (e.g. bf16 x, f32 param -> f32 result).
    out_dtype = jnp.promote_types(x.dtype, implicit.dtype)

    x2d = x.reshape(R, HW)
    # One scale value per row (tiny: N*C elements), already in compute dtype.
    scale_rows = jnp.broadcast_to(
        implicit.reshape(1, C).astype(out_dtype), (N, C)).reshape(R, 1)

    isz_x = jnp.dtype(x.dtype).itemsize
    isz_o = jnp.dtype(out_dtype).itemsize
    row_bytes = HW * (isz_x + isz_o)           # in + out bytes per row

    # Preferred path: lane block = full HW.  Only fall back to lane tiling when
    # even a minimal 8-row double-buffered block would blow the VMEM budget.
    use_full_hw = (2 * 8 * row_bytes) <= (vmem_limit_bytes // 2)

    if use_full_hw:
        # Rows per block targeting ~target_block_bytes of combined in+out bytes.
        rows = max(8, target_block_bytes // max(row_bytes, 1))
        tile_r = _round_up(min(rows, R), 8)
        # Give the (parallel) row axis at least 2 blocks so both v7x TCs get work.
        if R >= 16:
            tile_r = min(tile_r, _round_up(pl.cdiv(R, 2), 8))
        if tile_r >= R:
            tile_r = R                          # full dim: no 8-multiple needed
        grid = (pl.cdiv(R, tile_r),)
        in_specs = [
            pl.BlockSpec((tile_r, 1), lambda i: (i, 0)),
            pl.BlockSpec((tile_r, HW), lambda i: (i, 0)),
        ]
        out_spec = pl.BlockSpec((tile_r, HW), lambda i: (i, 0))
        dims = ("parallel",)
    else:
        # Very large HW: 2-D grid; lane tile a multiple of 128 sized to target.
        tile_r = 8 if R >= 8 else R
        tile_hw = max(
            128,
            (target_block_bytes // max(tile_r * (isz_x + isz_o), 1)) // 128 * 128,
        )
        tile_hw = min(tile_hw, max(128, (HW // 128) * 128))
        grid = (pl.cdiv(R, tile_r), pl.cdiv(HW, tile_hw))
        in_specs = [
            # scale index constant over innermost (lane) axis -> DMA is skipped
            # between consecutive lane steps.
            pl.BlockSpec((tile_r, 1), lambda i, j: (i, 0)),
            pl.BlockSpec((tile_r, tile_hw), lambda i, j: (i, j)),
        ]
        out_spec = pl.BlockSpec((tile_r, tile_hw), lambda i, j: (i, j))
        dims = ("parallel", "parallel")

    cost = pl.CostEstimate(
        flops=R * HW,
        transcendentals=0,
        bytes_accessed=R * HW * (isz_x + isz_o) + R * isz_o,
    )

    io_alias = {}
    if donate_x and out_dtype == x.dtype:
        io_alias = {1: 0}    # x2d (input 1) -> output 0, when the caller donates x

    out2d = pl.pallas_call(
        _implicitm_kernel,
        out_shape=jax.ShapeDtypeStruct((R, HW), out_dtype),
        grid_spec=pltpu.PrefetchScalarGridSpec(
            num_scalar_prefetch=0,
            grid=grid,
            in_specs=in_specs,
            out_specs=out_spec,
        ),
        compiler_params=pltpu.CompilerParams(
            dimension_semantics=dims,
            vmem_limit_bytes=vmem_limit_bytes,
        ),
        cost_estimate=cost,
        input_output_aliases=io_alias,
    )(scale_rows, x2d)

    return out2d.reshape(N, C, H, W)


def init_implicit_m_params(key, channel, mean=0.0, std=0.02):
    # nn.Parameter(torch.ones(1, C, 1, 1)) followed by nn.init.normal_(mean, std)
    # -> values are simply normal(mean, std).
    return mean + std * jax.random.normal(key, (1, channel, 1, 1), dtype=jnp.float32)


if __name__ == "__main__":
    key = jax.random.PRNGKey(0)
    k_param, k_x = jax.random.split(key)

    # 1) Basic aligned case.
    N, C, H, W = 2, 4, 16, 16
    implicit = init_implicit_m_params(k_param, C)
    x = jax.random.normal(k_x, (N, C, H, W), dtype=jnp.float32)
    out = jax.block_until_ready(implicit_m(x, implicit))
    ref = implicit * x
    assert out.shape == x.shape and out.dtype == ref.dtype
    assert jnp.allclose(out, ref, atol=1e-6, rtol=1e-6)

    # 2) Ragged / non-aligned shape (C not a multiple of 8, H*W not a multiple
    #    of 128): exercises full-dim blocks with no wrapper padding.
    x2 = jax.random.normal(k_x, (3, 5, 7, 7), dtype=jnp.float32)
    imp2 = init_implicit_m_params(k_param, 5)
    out2 = jax.block_until_ready(implicit_m(x2, imp2))
    assert jnp.allclose(out2, imp2 * x2, atol=1e-6, rtol=1e-6)

    # 3) Larger case with R not divisible by the row tile: exercises the
    #    multi-block ragged grid path (and the >=2-blocks-per-core split).
    x3 = jax.random.normal(k_x, (3, 85, 20, 20), dtype=jnp.float32)
    imp3 = init_implicit_m_params(k_param, 85)
    out3 = jax.block_until_ready(implicit_m(x3, imp3))
    assert jnp.allclose(out3, imp3 * x3, atol=1e-6, rtol=1e-6)

    # 4) Mixed precision: bf16 activations, f32 parameter -> f32 output
    #    (PyTorch type-promotion semantics).
    x4 = jax.random.normal(k_x, (2, 4, 16, 16), dtype=jnp.bfloat16)
    out4 = jax.block_until_ready(implicit_m(x4, implicit))
    ref4 = implicit * x4
    assert out4.dtype == ref4.dtype == jnp.float32
    assert jnp.allclose(out4, ref4, atol=1e-6, rtol=1e-6)

    print("KERNEL_OK")
</pallas_src>

<mosaic_0001>
module attributes {stable_mosaic.version = 11 : i64} {
  func.func @_implicitm_kernel(%arg0: i32, %arg1: memref<8x1xf32, #tpu.memory_space<vmem>>, %arg2: memref<8x256xf32, #tpu.memory_space<vmem>>, %arg3: memref<8x256xf32, #tpu.memory_space<vmem>>) attributes {dimension_semantics = [#tpu.dimension_semantics<parallel>], iteration_bounds = array<i64: 1>, scalar_prefetch = 0 : i64, scratch_operands = 0 : i64, tpu.core_type = #tpu.core_type<tc>, window_params = [{transform_indices = @transform_0, window_bounds = array<i64: 8, 1>}, {transform_indices = @transform_1, window_bounds = array<i64: 8, 256>}, {transform_indices = @transform_2, window_bounds = array<i64: 8, 256>}]} {
    %c0 = arith.constant 0 : index
    %c0_0 = arith.constant 0 : index
    %0 = vector.load %arg2[%c0, %c0_0] : memref<8x256xf32, #tpu.memory_space<vmem>>, vector<8x256xf32>
    %c0_1 = arith.constant 0 : index
    %c0_2 = arith.constant 0 : index
    %1 = vector.load %arg1[%c0_1, %c0_2] : memref<8x1xf32, #tpu.memory_space<vmem>>, vector<8x1xf32>
    %2 = vector.broadcast %1 : vector<8x1xf32> to vector<8x256xf32>
    %3 = arith.mulf %0, %2 : vector<8x256xf32>
    %c0_3 = arith.constant 0 : index
    %c0_4 = arith.constant 0 : index
    %4 = vector.load %arg3[%c0_3, %c0_4] : memref<8x256xf32, #tpu.memory_space<vmem>>, vector<8x256xf32>
    tpu.vector_store %arg3[%c0_3, %c0_4], %3 {strides = array<i32>} : memref<8x256xf32, #tpu.memory_space<vmem>>, vector<8x256xf32>,
    return
  }
  func.func @transform_0(%arg0: i32) -> (i32, i32) {
    %c0_i32 = arith.constant 0 : i32
    %c0_i32_0 = arith.constant 0 : i32
    return %arg0, %c0_i32 : i32, i32
  }
  func.func @transform_1(%arg0: i32) -> (i32, i32) {
    %c0_i32 = arith.constant 0 : i32
    %c0_i32_0 = arith.constant 0 : i32
    return %arg0, %c0_i32 : i32, i32
  }
  func.func @transform_2(%arg0: i32) -> (i32, i32) {
    %c0_i32 = arith.constant 0 : i32
    %c0_i32_0 = arith.constant 0 : i32
    return %arg0, %c0_i32 : i32, i32
  }
}

</mosaic_0001>

<llo_original>
// kernel: tpu_custom_call.1
$region0: #{tpu_custom_call.1}
  #allocation0 [shape = 'u32[]', space=smem, size = 0x4, offset = 0x4, fixed_abs, tag = 'smem constant byte address 0x4 - core index']
  #allocation1 [shape = 'u32[144,128]{1,0:T(1,128)}', space=vmem, size = 0x12000, scoped, tag = 'internal scratch']
  %s0 = inlined_call_operand.vmem [shape: f32[8,1], index: 0, kind: input, shape index: {}]
  %s1 = inlined_call_operand.hbm [shape: f32[8,256], index: 1, kind: input, shape index: {}]
  %s2 = inlined_call_operand.hbm [shape: f32[8,256], index: 2, kind: output, shape index: {}]
  %s3 = sld [smem:[#allocation0]]
  $region22: #{tpu_custom_call.1} parent=0
    _
  %s5 = ssub.s32 1, %s3
  %s6 = scalar_select 0, %s5, %s3
  $region1: #{tpu_custom_call.1} parent=0
    #allocation2 [shape = 'u8[8192]{0}', space=vmem, size = 0x2000, scoped, tag = 'input window, operand 1, single buffered']
    #allocation3 [shape = 's32[1]{0}', space=sflag, size = 0x4, scoped, tag = 'scoped memory for tpu_custom_call.1']
    #allocation4 [shape = 's32[1]{0}', space=sflag, size = 0x4, scoped, tag = 'scoped memory for tpu_custom_call.1']
    #allocation5 [shape = 'u8[8192]{0}', space=vmem, size = 0x2000, scoped, tag = 'output window, operand 0, single buffered']
    %7 = vsyncpa [#allocation3], 0
    %8 = vsyncpa [#allocation4], 0
    // Predicated region
    $region2: #{tpu_custom_call.1} parent=1 // pred_check
      _
    $region3: #{tpu_custom_call.1} parent=1 // pred_check_branch
      %10 = sbr.rel (0) target = $region5
    $region4: #{tpu_custom_call.1} parent=1 // pred_region
      _
    $region5: #{tpu_custom_call.1} parent=1 // pred_fallthru
      _
    // Predicated region
    $region6: #{tpu_custom_call.1} parent=1 // pred_check
      _
    $region7: #{tpu_custom_call.1} parent=1 // pred_check_branch
      %12 = sbr.rel (0) target = $region9
    $region8: #{tpu_custom_call.1} parent=1 // pred_region
      %s14 = ssub.s32 256, 256
      %15 = vsyncadd [#allocation3], %s14
      %s17 = sshll.u32 [#allocation2], 4
      %s18 = int_to_ptr.vmem [resolvable:$true] %s17
      %20 = dma.hbm_to_vmem [thread:$0]  %s1, 256, %s18, [#allocation3]
    $region9: #{tpu_custom_call.1} parent=1 // pred_fallthru
      _
    // Predicated region
    $region10: #{tpu_custom_call.1} parent=1 // pred_check
      _
    $region11: #{tpu_custom_call.1} parent=1 // pred_check_branch
      %22 = sbr.rel (0) target = $region13
    $region12: #{tpu_custom_call.1} parent=1 // pred_region
      %23 = dma.done [#allocation3], 256
    $region13: #{tpu_custom_call.1} parent=1 // pred_fallthru
      _
    %v24 = vld [vmem:[#allocation2] sm:$0xff]
    %v25 = vld [vmem:[#allocation2 + $0x8] sm:$0xff]
    %v26 = vld [vmem:[%s0] sm:$0xff]
    %28 = vset.pattern.permute.xlu0 0
    %29 = vperm.xlu0 %28, %v26
    %v30 = vpop.permute.xlu0 %29
    %v32 = vmul.f32 %v24, %v30
    %v33 = vmul.f32 %v25, %v30
    %34 = vst [vmem:[#allocation5] sm:$0xff] %v32
    %35 = vst [vmem:[#allocation5 + $0x8] sm:$0xff] %v33
    // Predicated region
    $region14: #{tpu_custom_call.1} parent=1 // pred_check
      _
    $region15: #{tpu_custom_call.1} parent=1 // pred_check_branch
      %37 = sbr.rel (0) target = $region17
    $region16: #{tpu_custom_call.1} parent=1 // pred_region
      %s39 = ssub.s32 256, 256
      %40 = vsyncadd [#allocation4], %s39
      %s42 = sshll.u32 [#allocation5], 4
      %s43 = int_to_ptr.vmem [resolvable:$true] %s42
      %45 = dma.vmem_to_hbm [thread:$0]  %s43, 256, %s2, [#allocation4]
    $region17: #{tpu_custom_call.1} parent=1 // pred_fallthru
      _
    // Predicated region
    $region18: #{tpu_custom_call.1} parent=1 // pred_check
      _
    $region19: #{tpu_custom_call.1} parent=1 // pred_check_branch
      %47 = sbr.rel (0) target = $region21
    $region20: #{tpu_custom_call.1} parent=1 // pred_region
      %48 = dma.done [#allocation4], 256
    $region21: #{tpu_custom_call.1} parent=1 // pred_fallthru
      _
    %49 = vsyncpa [#allocation3], 1
    %50 = vsyncpa [#allocation4], 1

</llo_original>
